<compile_context>
chip_gen: v7x
topology: tpu7x:2x2x1
jax: 0.10.0
libtpu: 0.0.40
codegen_flags: <defaults>
</compile_context>

<pallas_src>
import functools
import math

import jax
import jax.numpy as jnp
from jax import lax
from jax.experimental import pallas as pl
from jax.experimental.pallas import tpu as pltpu


def _round_up(x, m):
    return ((x + m - 1) // m) * m


def _instance_loss_kernel(q_ref, k_ref, p_ref, loss_ref,
                          qs_ref, m_sc, l_sc, pos_sc,
                          *, n_valid, inv_temp):
    """One (row-block, col-block) step of the tiled online-logsumexp NT-Xent loss."""
    qi = pl.program_id(0)
    ki = pl.program_id(1)
    tq = q_ref.shape[0]
    tk = k_ref.shape[0]

    NEG = jnp.float32(-1e30)  # large-negative mask value (NaN-proof vs -inf)

    @pl.when(ki == 0)
    def _init():
        m_sc[...] = jnp.full_like(m_sc, NEG)
        l_sc[...] = jnp.zeros_like(l_sc)
        # Hoisted once per row block (q/p index_maps are ki-independent):
        #  * fold 1/T into q in f32,
        #  * positive logit pos[i] = <z[i]/T, z[pair(i)]> (f32 row-wise dot),
        #  * cache the (bf16) MXU operand so scale/cast is not redone every ki step.
        q = q_ref[...].astype(jnp.float32) * jnp.float32(inv_temp)
        p = p_ref[...].astype(jnp.float32)
        pos_sc[...] = jnp.sum(q * p, axis=1, keepdims=True)
        qs_ref[...] = q.astype(qs_ref.dtype)

    # (tq, tk) similarity tile on the MXU: bf16 (or f32) operands, f32 accumulation.
    sim = lax.dot_general(
        qs_ref[...], k_ref[...],
        dimension_numbers=(((1,), (1,)), ((), ())),
        preferred_element_type=jnp.float32,
    )

    def _online_update(s):
        m_prev = m_sc[...]
        m_new = jnp.maximum(m_prev, jnp.max(s, axis=1, keepdims=True))
        alpha = jnp.exp(m_prev - m_new)
        l_sc[...] = alpha * l_sc[...] + jnp.sum(jnp.exp(s - m_new), axis=1, keepdims=True)
        m_sc[...] = m_new

    # Only blocks that can touch the diagonal (self-similarity) or padded columns pay
    # for the iota/compare/select mask; everything else takes the unmasked fast path.
    q_lo = qi * tq
    k_lo = ki * tk
    diag_overlap = jnp.logical_and(k_lo < q_lo + tq, q_lo < k_lo + tk)
    has_pad_cols = (k_lo + tk) > n_valid
    need_mask = jnp.logical_or(diag_overlap, has_pad_cols)

    @pl.when(need_mask)
    def _masked():
        row_g = q_lo + lax.broadcasted_iota(jnp.int32, (tq, tk), 0)
        col_g = k_lo + lax.broadcasted_iota(jnp.int32, (tq, tk), 1)
        _online_update(jnp.where((col_g == row_g) | (col_g >= n_valid), NEG, sim))

    @pl.when(jnp.logical_not(need_mask))
    def _unmasked():
        _online_update(sim)

    @pl.when(ki == pl.num_programs(1) - 1)
    def _finalize():
        lse = m_sc[...] + jnp.log(l_sc[...])                 # (tq, 1)
        per_row = lse - pos_sc[...]                          # CE with label 0
        row_idx = q_lo + lax.broadcasted_iota(jnp.int32, (tq, 1), 0)
        loss_ref[...] = jnp.where(row_idx < n_valid, per_row, jnp.float32(0.0))


def _vmem_bytes_estimate(bq, bk, d_pad, in_bytes):
    """Conservative VMEM estimate: streamed windows + scratch + in-kernel f32 temps."""
    stream = 2 * (2 * bq + bk) * d_pad * in_bytes       # q, p, k double-buffered windows
    qscr = bq * d_pad * in_bytes                         # cached scaled MXU operand
    stats_out = 5 * bq * 128 * 4                         # (bq, 1) scratch/out pad to 128 lanes
    temps = 4 * bq * bk * 4                              # sim / masked / exp temporaries
    return stream + qscr + stats_out + temps


def _vmem_capacity_bytes():
    try:
        cap = getattr(pltpu.get_tpu_info(), "vmem_capacity_bytes", None)
        if cap:
            return int(cap)
    except Exception:
        pass
    return 64 << 20  # conservative (v7x-sized) fallback


def instance_loss(z_i, z_j, temperature, *, block_q=None, block_k=None, use_bf16=True):
    """z_i, z_j: (batch, D). Returns the scalar NT-Xent instance loss (float32)."""
    assert z_i.shape == z_j.shape and z_i.ndim == 2
    batch, d = z_i.shape
    n = 2 * batch

    in_dtype = jnp.bfloat16 if use_bf16 else jnp.float32
    in_bytes = 2 if use_bf16 else 4
    d_pad = _round_up(d, 128)                       # MXU-aligned contraction dim

    vmem_cap = _vmem_capacity_bytes()               # generation-aware (64 MiB v7x, 128 MiB v5e/v6e)
    budget = int(0.65 * vmem_cap)                   # headroom for compiler-internal scratch

    # Row blocks: big (>= ~1us of per-step work), and >= 2 row blocks when N allows so
    # the "parallel" axis shards across both v7x TensorCores.
    if block_q is None:
        if n <= 256:
            block_q = _round_up(n, 16)
        else:
            block_q = min(512, _round_up((n + 1) // 2, 128))
        while block_q > 64 and _vmem_bytes_estimate(block_q, block_q, d_pad, in_bytes) > budget:
            block_q = _round_up(block_q // 2, 16)   # very large D: shrink streamed windows
    block_q = max(16, _round_up(block_q, 16))       # bf16 sublane tile

    # Column (reduction) blocks: keep the whole padded z resident in VMEM when it fits
    # (z DMA'd from HBM once; ki axis collapses to a single step); else square tiles.
    n_pad_q = _round_up(n, block_q)
    if block_k is None:
        if _vmem_bytes_estimate(block_q, n_pad_q, d_pad, in_bytes) <= budget:
            block_k = n_pad_q
        else:
            block_k = block_q
    block_k = max(16, _round_up(block_k, 16))

    # Keep row/col padding bounded (no lcm blow-up for non-nested user tile sizes).
    tile = math.lcm(block_q, block_k)
    if tile > max(_round_up(n, block_q), _round_up(n, block_k)):
        block_k = block_q
        tile = block_q
    n_pad = _round_up(n, tile)
    block_k = min(block_k, n_pad)

    z = jnp.concatenate([z_i, z_j], axis=0).astype(in_dtype)       # (N, D) storage dtype
    z_p = jnp.pad(z, ((0, n_pad - n), (0, d_pad - d)))

    # Positive-pair operand z_pair[i] = z[(i + batch) mod N].  When the row tiling lines
    # up with `batch`, re-index z itself instead of materializing z_pair in HBM.
    pair_from_z = (n_pad == n) and (batch % block_q == 0)
    if pair_from_z:
        pair_off = batch // block_q
        nq = n // block_q
        p_index_map = lambda qi, ki, _o=pair_off, _n=nq: ((qi + _o) % _n, 0)
        p_operand = z_p
    else:
        z_pair = jnp.concatenate([z_j, z_i], axis=0).astype(in_dtype)
        p_operand = jnp.pad(z_pair, ((0, n_pad - n), (0, d_pad - d)))
        p_index_map = lambda qi, ki: (qi, 0)

    grid = (n_pad // block_q, n_pad // block_k)

    est = _vmem_bytes_estimate(block_q, block_k, d_pad, in_bytes)
    vmem_limit = int(min(int(0.9 * vmem_cap), max(32 << 20, 2 * est)))

    kernel = functools.partial(
        _instance_loss_kernel, n_valid=n, inv_temp=float(1.0 / temperature))

    per_row = pl.pallas_call(
        kernel,
        out_shape=jax.ShapeDtypeStruct((n_pad, 1), jnp.float32),
        grid_spec=pltpu.PrefetchScalarGridSpec(
            num_scalar_prefetch=0,
            grid=grid,
            in_specs=[
                pl.BlockSpec((block_q, d_pad), lambda qi, ki: (qi, 0)),   # q rows
                pl.BlockSpec((block_k, d_pad), lambda qi, ki: (ki, 0)),   # k cols (constant -> resident when grid[1]==1)
                pl.BlockSpec((block_q, d_pad), p_index_map),              # positive-pair rows
            ],
            out_specs=pl.BlockSpec((block_q, 1), lambda qi, ki: (qi, 0)),
            scratch_shapes=[
                pltpu.VMEM((block_q, d_pad), in_dtype),   # cached scaled MXU q operand
                pltpu.VMEM((block_q, 1), jnp.float32),    # running max
                pltpu.VMEM((block_q, 1), jnp.float32),    # running exp-sum
                pltpu.VMEM((block_q, 1), jnp.float32),    # positive logits
            ],
        ),
        compiler_params=pltpu.CompilerParams(
            dimension_semantics=("parallel", "arbitrary"),
            vmem_limit_bytes=vmem_limit,
        ),
    )(z_p, z_p, p_operand)

    return jnp.sum(per_row) / jnp.float32(n)


def _reference_loss(z_i, z_j, temperature):
    """Pure-JAX f32 reference mirroring the PyTorch forward."""
    batch = z_i.shape[0]
    n = 2 * batch
    z = jnp.concatenate([z_i, z_j], axis=0).astype(jnp.float32)
    sim = (z @ z.T) / temperature
    idx = jnp.arange(n)
    pair = jnp.where(idx < batch, idx + batch, idx - batch)
    pos = sim[idx, pair]
    sim_masked = jnp.where(jnp.eye(n, dtype=bool), -jnp.inf, sim)
    lse = jax.scipy.special.logsumexp(sim_masked, axis=1)
    return jnp.sum(lse - pos) / n


if __name__ == "__main__":
    temperature = 0.5
    key = jax.random.PRNGKey(0)
    k1, k2, k3, k4, k5, k6 = jax.random.split(key, 6)

    # Test 1: module-sized small shapes, default config (bf16 MXU operands, resident-k,
    # single tile).  Looser tolerance vs. the f32 reference because logits are bf16.
    z_i = jax.random.normal(k1, (8, 32), dtype=jnp.float32)
    z_j = jax.random.normal(k2, (8, 32), dtype=jnp.float32)
    loss = jax.block_until_ready(instance_loss(z_i, z_j, temperature))
    ref = jax.block_until_ready(_reference_loss(z_i, z_j, temperature))
    assert jnp.allclose(loss, ref, rtol=2e-2, atol=2e-2), (loss, ref)

    # Test 2: non-tile-aligned N with forced small blocks, f32 path -> multi-block grid
    # exercising online-logsumexp accumulation, diag/pad mask gating and the
    # materialized z_pair fallback, with tight tolerance.
    z_i2 = jax.random.normal(k3, (20, 48), dtype=jnp.float32)
    z_j2 = jax.random.normal(k4, (20, 48), dtype=jnp.float32)
    loss2 = jax.block_until_ready(
        instance_loss(z_i2, z_j2, temperature, block_q=16, block_k=16, use_bf16=False))
    ref2 = jax.block_until_ready(_reference_loss(z_i2, z_j2, temperature))
    assert jnp.allclose(loss2, ref2, rtol=1e-4, atol=1e-4), (loss2, ref2)

    # Test 3: tiling aligned with `batch` -> positive pairs read straight out of z
    # (no z_pair materialized in HBM), multi-block bf16 path.
    z_i3 = jax.random.normal(k5, (32, 32), dtype=jnp.float32)
    z_j3 = jax.random.normal(k6, (32, 32), dtype=jnp.float32)
    loss3 = jax.block_until_ready(
        instance_loss(z_i3, z_j3, temperature, block_q=16, block_k=16))
    ref3 = jax.block_until_ready(_reference_loss(z_i3, z_j3, temperature))
    assert jnp.allclose(loss3, ref3, rtol=2e-2, atol=2e-2), (loss3, ref3)

    print("KERNEL_OK")
</pallas_src>

<mosaic_0001>
module attributes {stable_mosaic.version = 11 : i64} {
  func.func @_instance_loss_kernel(%arg0: i32, %arg1: i32, %arg2: memref<16x128xbf16, #tpu.memory_space<vmem>>, %arg3: memref<16x128xbf16, #tpu.memory_space<vmem>>, %arg4: memref<16x128xbf16, #tpu.memory_space<vmem>>, %arg5: memref<16x1xf32, #tpu.memory_space<vmem>>, %arg6: memref<16x128xbf16, #tpu.memory_space<vmem>>, %arg7: memref<16x1xf32, #tpu.memory_space<vmem>>, %arg8: memref<16x1xf32, #tpu.memory_space<vmem>>, %arg9: memref<16x1xf32, #tpu.memory_space<vmem>>) attributes {dimension_semantics = [#tpu.dimension_semantics<parallel>, #tpu.dimension_semantics<arbitrary>], iteration_bounds = array<i64: 1, 1>, scalar_prefetch = 0 : i64, scratch_operands = 4 : i64, tpu.core_type = #tpu.core_type<tc>, window_params = [{transform_indices = @transform_0, window_bounds = array<i64: 16, 128>}, {transform_indices = @transform_1, window_bounds = array<i64: 16, 128>}, {transform_indices = @transform_2, window_bounds = array<i64: 16, 128>}, {transform_indices = @transform_3, window_bounds = array<i64: 16, 1>}]} {
    %c0_i32 = arith.constant 0 : i32
    %0 = arith.cmpi eq, %arg1, %c0_i32 : i32
    %1 = arith.extui %0 : i1 to i32
    %cst = arith.constant -1.000000e+30 : f32
    %c0_i32_0 = arith.constant 0 : i32
    %2 = arith.cmpi ne, %1, %c0_i32_0 : i32
    scf.if %2 {
      %24 = vector.broadcast %cst : f32 to vector<16x1xf32>
      %c0_15 = arith.constant 0 : index
      %c0_16 = arith.constant 0 : index
      %25 = vector.load %arg7[%c0_15, %c0_16] : memref<16x1xf32, #tpu.memory_space<vmem>>, vector<16x1xf32>
      tpu.vector_store %arg7[%c0_15, %c0_16], %24 {strides = array<i32>} : memref<16x1xf32, #tpu.memory_space<vmem>>, vector<16x1xf32>,
      %cst_17 = arith.constant 0.000000e+00 : f32
      %26 = vector.broadcast %cst_17 : f32 to vector<16x1xf32>
      %c0_18 = arith.constant 0 : index
      %c0_19 = arith.constant 0 : index
      %27 = vector.load %arg8[%c0_18, %c0_19] : memref<16x1xf32, #tpu.memory_space<vmem>>, vector<16x1xf32>
      tpu.vector_store %arg8[%c0_18, %c0_19], %26 {strides = array<i32>} : memref<16x1xf32, #tpu.memory_space<vmem>>, vector<16x1xf32>,
      %c0_20 = arith.constant 0 : index
      %c0_21 = arith.constant 0 : index
      %28 = vector.load %arg2[%c0_20, %c0_21] : memref<16x128xbf16, #tpu.memory_space<vmem>>, vector<16x128xbf16>
      %29 = arith.extf %28 : vector<16x128xbf16> to vector<16x128xf32>
      %cst_22 = arith.constant 2.000000e+00 : f32
      %30 = vector.broadcast %cst_22 : f32 to vector<16x128xf32>
      %31 = arith.mulf %29, %30 : vector<16x128xf32>
      %c0_23 = arith.constant 0 : index
      %c0_24 = arith.constant 0 : index
      %32 = vector.load %arg4[%c0_23, %c0_24] : memref<16x128xbf16, #tpu.memory_space<vmem>>, vector<16x128xbf16>
      %33 = arith.extf %32 : vector<16x128xbf16> to vector<16x128xf32>
      %34 = arith.mulf %31, %33 : vector<16x128xf32>
      %cst_25 = arith.constant dense<0.000000e+00> : vector<16xf32>
      %35 = vector.multi_reduction <add>, %34, %cst_25 [1] : vector<16x128xf32> to vector<16xf32>
      %36 = vector.shape_cast %35 : vector<16xf32> to vector<16x1xf32>
      %c0_26 = arith.constant 0 : index
      %c0_27 = arith.constant 0 : index
      %37 = vector.load %arg9[%c0_26, %c0_27] : memref<16x1xf32, #tpu.memory_space<vmem>>, vector<16x1xf32>
      tpu.vector_store %arg9[%c0_26, %c0_27], %36 {strides = array<i32>} : memref<16x1xf32, #tpu.memory_space<vmem>>, vector<16x1xf32>,
      %38 = arith.truncf %31 : vector<16x128xf32> to vector<16x128xbf16>
      %c0_28 = arith.constant 0 : index
      %c0_29 = arith.constant 0 : index
      %39 = vector.load %arg6[%c0_28, %c0_29] : memref<16x128xbf16, #tpu.memory_space<vmem>>, vector<16x128xbf16>
      tpu.vector_store %arg6[%c0_28, %c0_29], %38 {strides = array<i32>} : memref<16x128xbf16, #tpu.memory_space<vmem>>, vector<16x128xbf16>,
    } else {
    }
    %c0 = arith.constant 0 : index
    %c0_1 = arith.constant 0 : index
    %3 = vector.load %arg6[%c0, %c0_1] : memref<16x128xbf16, #tpu.memory_space<vmem>>, vector<16x128xbf16>
    %c0_2 = arith.constant 0 : index
    %c0_3 = arith.constant 0 : index
    %4 = vector.load %arg3[%c0_2, %c0_3] : memref<16x128xbf16, #tpu.memory_space<vmem>>, vector<16x128xbf16>
    %cst_4 = arith.constant dense<0.000000e+00> : vector<16x16xf32>
    %5 = tpu.matmul %3, %4, %cst_4 {dimension_numbers = #tpu.dot_dimension_numbers<[1], [1], [0], [0], [0, 0, 1, 0], [], []>} : vector<16x128xbf16>, vector<16x128xbf16>, vector<16x16xf32> -> vector<16x16xf32>
    %c16_i32 = arith.constant 16 : i32
    %6 = arith.muli %arg0, %c16_i32 : i32
    %c16_i32_5 = arith.constant 16 : i32
    %7 = arith.muli %arg1, %c16_i32_5 : i32
    %c16_i32_6 = arith.constant 16 : i32
    %8 = arith.addi %6, %c16_i32_6 : i32
    %9 = arith.cmpi slt, %7, %8 : i32
    %c16_i32_7 = arith.constant 16 : i32
    %10 = arith.addi %7, %c16_i32_7 : i32
    %11 = arith.cmpi slt, %6, %10 : i32
    %12 = arith.andi %9, %11 : i1
    %c16_i32_8 = arith.constant 16 : i32
    %13 = arith.addi %7, %c16_i32_8 : i32
    %c16_i32_9 = arith.constant 16 : i32
    %14 = arith.cmpi sgt, %13, %c16_i32_9 : i32
    %15 = arith.ori %12, %14 : i1
    %16 = arith.extui %15 : i1 to i32
    %cst_10 = arith.constant -1.000000e+30 : f32
    %c0_i32_11 = arith.constant 0 : i32
    %17 = arith.cmpi ne, %16, %c0_i32_11 : i32
    scf.if %17 {
      %24 = tpu.iota {dimensions = array<i32: 0>} : vector<16x16xi32>
      %25 = vector.broadcast %6 : i32 to vector<16x16xi32>
      %26 = arith.addi %25, %24 : vector<16x16xi32>
      %27 = tpu.iota {dimensions = array<i32: 1>} : vector<16x16xi32>
      %28 = vector.broadcast %7 : i32 to vector<16x16xi32>
      %29 = arith.addi %28, %27 : vector<16x16xi32>
      %30 = arith.cmpi eq, %29, %26 : vector<16x16xi32>
      %c16_i32_15 = arith.constant 16 : i32
      %31 = vector.broadcast %c16_i32_15 : i32 to vector<16x16xi32>
      %32 = arith.cmpi sge, %29, %31 : vector<16x16xi32>
      %33 = arith.ori %30, %32 : vector<16x16xi1>
      %34 = vector.broadcast %cst_10 : f32 to vector<16x16xf32>
      %35 = arith.select %33, %34, %5 : vector<16x16xi1>, vector<16x16xf32>
      %c0_16 = arith.constant 0 : index
      %c0_17 = arith.constant 0 : index
      %36 = vector.load %arg7[%c0_16, %c0_17] : memref<16x1xf32, #tpu.memory_space<vmem>>, vector<16x1xf32>
      %cst_18 = arith.constant dense<0xFF800000> : vector<16xf32>
      %37 = vector.multi_reduction <maximumf>, %35, %cst_18 [1] : vector<16x16xf32> to vector<16xf32>
      %38 = vector.shape_cast %37 : vector<16xf32> to vector<16x1xf32>
      %39 = arith.maximumf %36, %38 : vector<16x1xf32>
      %40 = arith.subf %36, %39 : vector<16x1xf32>
      %41 = math.exp %40 : vector<16x1xf32>
      %c0_19 = arith.constant 0 : index
      %c0_20 = arith.constant 0 : index
      %42 = vector.load %arg8[%c0_19, %c0_20] : memref<16x1xf32, #tpu.memory_space<vmem>>, vector<16x1xf32>
      %43 = arith.mulf %41, %42 : vector<16x1xf32>
      %44 = vector.broadcast %39 : vector<16x1xf32> to vector<16x16xf32>
      %45 = arith.subf %35, %44 : vector<16x16xf32>
      %46 = math.exp %45 : vector<16x16xf32>
      %cst_21 = arith.constant dense<0.000000e+00> : vector<16xf32>
      %47 = vector.multi_reduction <add>, %46, %cst_21 [1] : vector<16x16xf32> to vector<16xf32>
      %48 = vector.shape_cast %47 : vector<16xf32> to vector<16x1xf32>
      %49 = arith.addf %43, %48 : vector<16x1xf32>
      %c0_22 = arith.constant 0 : index
      %c0_23 = arith.constant 0 : index
      %50 = vector.load %arg8[%c0_22, %c0_23] : memref<16x1xf32, #tpu.memory_space<vmem>>, vector<16x1xf32>
      tpu.vector_store %arg8[%c0_22, %c0_23], %49 {strides = array<i32>} : memref<16x1xf32, #tpu.memory_space<vmem>>, vector<16x1xf32>,
      %c0_24 = arith.constant 0 : index
      %c0_25 = arith.constant 0 : index
      %51 = vector.load %arg7[%c0_24, %c0_25] : memref<16x1xf32, #tpu.memory_space<vmem>>, vector<16x1xf32>
      tpu.vector_store %arg7[%c0_24, %c0_25], %39 {strides = array<i32>} : memref<16x1xf32, #tpu.memory_space<vmem>>, vector<16x1xf32>,
    } else {
    }
    %true = arith.constant true
    %18 = arith.xori %15, %true : i1
    %19 = arith.extui %18 : i1 to i32
    %c0_i32_12 = arith.constant 0 : i32
    %20 = arith.cmpi ne, %19, %c0_i32_12 : i32
    scf.if %20 {
      %c0_15 = arith.constant 0 : index
      %c0_16 = arith.constant 0 : index
      %24 = vector.load %arg7[%c0_15, %c0_16] : memref<16x1xf32, #tpu.memory_space<vmem>>, vector<16x1xf32>
      %cst_17 = arith.constant dense<0xFF800000> : vector<16xf32>
      %25 = vector.multi_reduction <maximumf>, %5, %cst_17 [1] : vector<16x16xf32> to vector<16xf32>
      %26 = vector.shape_cast %25 : vector<16xf32> to vector<16x1xf32>
      %27 = arith.maximumf %24, %26 : vector<16x1xf32>
      %28 = arith.subf %24, %27 : vector<16x1xf32>
      %29 = math.exp %28 : vector<16x1xf32>
      %c0_18 = arith.constant 0 : index
      %c0_19 = arith.constant 0 : index
      %30 = vector.load %arg8[%c0_18, %c0_19] : memref<16x1xf32, #tpu.memory_space<vmem>>, vector<16x1xf32>
      %31 = arith.mulf %29, %30 : vector<16x1xf32>
      %32 = vector.broadcast %27 : vector<16x1xf32> to vector<16x16xf32>
      %33 = arith.subf %5, %32 : vector<16x16xf32>
      %34 = math.exp %33 : vector<16x16xf32>
      %cst_20 = arith.constant dense<0.000000e+00> : vector<16xf32>
      %35 = vector.multi_reduction <add>, %34, %cst_20 [1] : vector<16x16xf32> to vector<16xf32>
      %36 = vector.shape_cast %35 : vector<16xf32> to vector<16x1xf32>
      %37 = arith.addf %31, %36 : vector<16x1xf32>
      %c0_21 = arith.constant 0 : index
      %c0_22 = arith.constant 0 : index
      %38 = vector.load %arg8[%c0_21, %c0_22] : memref<16x1xf32, #tpu.memory_space<vmem>>, vector<16x1xf32>
      tpu.vector_store %arg8[%c0_21, %c0_22], %37 {strides = array<i32>} : memref<16x1xf32, #tpu.memory_space<vmem>>, vector<16x1xf32>,
      %c0_23 = arith.constant 0 : index
      %c0_24 = arith.constant 0 : index
      %39 = vector.load %arg7[%c0_23, %c0_24] : memref<16x1xf32, #tpu.memory_space<vmem>>, vector<16x1xf32>
      tpu.vector_store %arg7[%c0_23, %c0_24], %27 {strides = array<i32>} : memref<16x1xf32, #tpu.memory_space<vmem>>, vector<16x1xf32>,
    } else {
    }
    %c0_i32_13 = arith.constant 0 : i32
    %21 = arith.cmpi eq, %arg1, %c0_i32_13 : i32
    %22 = arith.extui %21 : i1 to i32
    %c0_i32_14 = arith.constant 0 : i32
    %23 = arith.cmpi ne, %22, %c0_i32_14 : i32
    scf.if %23 {
      %c0_15 = arith.constant 0 : index
      %c0_16 = arith.constant 0 : index
      %24 = vector.load %arg7[%c0_15, %c0_16] : memref<16x1xf32, #tpu.memory_space<vmem>>, vector<16x1xf32>
      %c0_17 = arith.constant 0 : index
      %c0_18 = arith.constant 0 : index
      %25 = vector.load %arg8[%c0_17, %c0_18] : memref<16x1xf32, #tpu.memory_space<vmem>>, vector<16x1xf32>
      %26 = math.log %25 : vector<16x1xf32>
      %27 = arith.addf %24, %26 : vector<16x1xf32>
      %c0_19 = arith.constant 0 : index
      %c0_20 = arith.constant 0 : index
      %28 = vector.load %arg9[%c0_19, %c0_20] : memref<16x1xf32, #tpu.memory_space<vmem>>, vector<16x1xf32>
      %29 = arith.subf %27, %28 : vector<16x1xf32>
      %30 = tpu.iota {dimensions = array<i32: 0>} : vector<16x1xi32>
      %31 = vector.broadcast %6 : i32 to vector<16x1xi32>
      %32 = arith.addi %31, %30 : vector<16x1xi32>
      %c16_i32_21 = arith.constant 16 : i32
      %33 = vector.broadcast %c16_i32_21 : i32 to vector<16x1xi32>
      %34 = arith.cmpi slt, %32, %33 : vector<16x1xi32>
      %cst_22 = arith.constant 0.000000e+00 : f32
      %35 = vector.broadcast %cst_22 : f32 to vector<16x1xf32>
      %36 = arith.select %34, %29, %35 : vector<16x1xi1>, vector<16x1xf32>
      %c0_23 = arith.constant 0 : index
      %c0_24 = arith.constant 0 : index
      %37 = vector.load %arg5[%c0_23, %c0_24] : memref<16x1xf32, #tpu.memory_space<vmem>>, vector<16x1xf32>
      tpu.vector_store %arg5[%c0_23, %c0_24], %36 {strides = array<i32>} : memref<16x1xf32, #tpu.memory_space<vmem>>, vector<16x1xf32>,
    } else {
    }
    return
  }
  func.func @transform_0(%arg0: i32, %arg1: i32) -> (i32, i32) {
    %c0_i32 = arith.constant 0 : i32
    %c0_i32_0 = arith.constant 0 : i32
    return %arg0, %c0_i32 : i32, i32
  }
  func.func @transform_1(%arg0: i32, %arg1: i32) -> (i32, i32) {
    %c0_i32 = arith.constant 0 : i32
    %c0_i32_0 = arith.constant 0 : i32
    return %arg1, %c0_i32 : i32, i32
  }
  func.func @transform_2(%arg0: i32, %arg1: i32) -> (i32, i32) {
    %c0_i32 = arith.constant 0 : i32
    %c0_i32_0 = arith.constant 0 : i32
    return %arg0, %c0_i32 : i32, i32
  }
  func.func @transform_3(%arg0: i32, %arg1: i32) -> (i32, i32) {
    %c0_i32 = arith.constant 0 : i32
    %c0_i32_0 = arith.constant 0 : i32
    return %arg0, %c0_i32 : i32, i32
  }
}

</mosaic_0001>

<llo_original>
// kernel: tpu_custom_call.1
$region0: #{tpu_custom_call.1}
  #allocation0 [shape = 'u32[]', space=smem, size = 0x4, offset = 0x4, fixed_abs, tag = 'smem constant byte address 0x4 - core index']
  #allocation1 [shape = 'u32[144,128]{1,0:T(1,128)}', space=vmem, size = 0x12000, scoped, tag = 'internal scratch']
  #allocation2 [shape = 'bf16[16,128]{1,0:T(16,128)(2,1)}', space=vmem, size = 0x1000, scoped, tag = 'scratch operand']
  #allocation3 [shape = 'f32[16,1]{1,0:T(8,128)}', space=vmem, size = 0x2000, scoped, tag = 'scratch operand']
  #allocation4 [shape = 'f32[16,1]{1,0:T(8,128)}', space=vmem, size = 0x2000, scoped, tag = 'scratch operand']
  #allocation5 [shape = 'f32[16,1]{1,0:T(8,128)}', space=vmem, size = 0x2000, scoped, tag = 'scratch operand']
  %s0 = inlined_call_operand.hbm [shape: bf16[16,128], index: 0, kind: input, shape index: {}]
  %s1 = inlined_call_operand.hbm [shape: bf16[16,128], index: 1, kind: input, shape index: {}]
  %s2 = inlined_call_operand.hbm [shape: bf16[16,128], index: 2, kind: input, shape index: {}]
  %s3 = inlined_call_operand.vmem [shape: f32[16,1], index: 3, kind: output, shape index: {}]
  %s4 = sld [smem:[#allocation0]]
  $region50: #{tpu_custom_call.1} parent=0
    _
  %s6 = ssub.s32 1, %s4
  %s7 = scalar_select 0, %s6, %s4
  $region1: #{tpu_custom_call.1} parent=0
    #allocation6 [shape = 'u8[4096]{0}', space=vmem, size = 0x1000, scoped, tag = 'input window, operand 0, single buffered']
    #allocation7 [shape = 's32[1]{0}', space=sflag, size = 0x4, scoped, tag = 'scoped memory for tpu_custom_call.1']
    #allocation8 [shape = 'u8[4096]{0}', space=vmem, size = 0x1000, scoped, tag = 'input window, operand 1, single buffered']
    #allocation9 [shape = 's32[1]{0}', space=sflag, size = 0x4, scoped, tag = 'scoped memory for tpu_custom_call.1']
    #allocation10 [shape = 'u8[4096]{0}', space=vmem, size = 0x1000, scoped, tag = 'input window, operand 2, single buffered']
    %8 = vsyncpa [#allocation7], 0
    %9 = vsyncpa [#allocation9], 0
    // Predicated region
    $region2: #{tpu_custom_call.1} parent=1 // pred_check
      _
    $region3: #{tpu_custom_call.1} parent=1 // pred_check_branch
      %11 = sbr.rel (0) target = $region5
    $region4: #{tpu_custom_call.1} parent=1 // pred_region
      %s13 = ssub.s32 128, 128
      %14 = vsyncadd [#allocation7], %s13
      %s15 = sshll.u32 [#allocation6], 4
      %s16 = int_to_ptr.vmem [resolvable:$true] %s15
      %21 = dma.hbm_to_vmem [thread:$0]  %s0, 128, %s16, [#allocation7], 64, 64, 4
    $region5: #{tpu_custom_call.1} parent=1 // pred_fallthru
      _
    // Predicated region
    $region6: #{tpu_custom_call.1} parent=1 // pred_check
      _
    $region7: #{tpu_custom_call.1} parent=1 // pred_check_branch
      %23 = sbr.rel (0) target = $region9
    $region8: #{tpu_custom_call.1} parent=1 // pred_region
      %s25 = ssub.s32 128, 128
      %26 = vsyncadd [#allocation9], %s25
      %s27 = sshll.u32 [#allocation8], 4
      %s28 = int_to_ptr.vmem [resolvable:$true] %s27
      %33 = dma.hbm_to_vmem [thread:$0]  %s1, 128, %s28, [#allocation9], 64, 64, 4
    $region9: #{tpu_custom_call.1} parent=1 // pred_fallthru
      _
    // Predicated region
    $region10: #{tpu_custom_call.1} parent=1 // pred_check
      _
    $region11: #{tpu_custom_call.1} parent=1 // pred_check_branch
      %35 = sbr.rel (0) target = $region13
    $region12: #{tpu_custom_call.1} parent=1 // pred_region
      %s37 = ssub.s32 128, 128
      %38 = vsyncadd [#allocation9], %s37
      %s39 = sshll.u32 [#allocation10], 4
      %s40 = int_to_ptr.vmem [resolvable:$true] %s39
      %45 = dma.hbm_to_vmem [thread:$0]  %s2, 128, %s40, [#allocation9], 64, 64, 4
    $region13: #{tpu_custom_call.1} parent=1 // pred_fallthru
      _
    // Predicated region
    $region14: #{tpu_custom_call.1} parent=1 // pred_check
      _
    $region15: #{tpu_custom_call.1} parent=1 // pred_check_branch
      %47 = sbr.rel (0) target = $region17
    $region16: #{tpu_custom_call.1} parent=1 // pred_region
      %48 = dma.done [#allocation7], 128
    $region17: #{tpu_custom_call.1} parent=1 // pred_fallthru
      _
    // Predicated region
    $region18: #{tpu_custom_call.1} parent=1 // pred_check
      _
    $region19: #{tpu_custom_call.1} parent=1 // pred_check_branch
      %50 = sbr.rel (0) target = $region21
    $region20: #{tpu_custom_call.1} parent=1 // pred_region
      %51 = dma.done [#allocation9], 128
    $region21: #{tpu_custom_call.1} parent=1 // pred_fallthru
      _
    // Predicated region
    $region22: #{tpu_custom_call.1} parent=1 // pred_check
      _
    $region23: #{tpu_custom_call.1} parent=1 // pred_check_branch
      %53 = sbr.rel (0) target = $region25
    $region24: #{tpu_custom_call.1} parent=1 // pred_region
      %54 = dma.done [#allocation9], 128
    $region25: #{tpu_custom_call.1} parent=1 // pred_fallthru
      _
    %p56 = scmp.eq.s32.totalorder 0, 0
    // Predicated region
    $region26: #{tpu_custom_call.1} parent=1 // pred_check
      %p57 = pneg %p56
    $region27: #{tpu_custom_call.1} parent=1 // pred_check_branch
      %59 = sbr.rel (%p57) target = $region29
    $region28: #{tpu_custom_call.1} parent=1 // pred_region
      %vm60 = vcmask 7168
      %61 = vst.msk [vmem:[#allocation3] sm:$0xff] %vm60, -1e+30
      %62 = vst.msk [vmem:[#allocation3 + $0x8] sm:$0xff] %vm60, -1e+30
      %63 = vst.msk [vmem:[#allocation4] sm:$0xff] %vm60, 0.0
      %64 = vst.msk [vmem:[#allocation4 + $0x8] sm:$0xff] %vm60, 0.0
      %v65 = vld [vmem:[#allocation6] sm:$0xf]
      %v66 = vld [vmem:[#allocation6 + $0x4] sm:$0xf]
      %v67 = vunpack.c.l.bf16 %v65
      %v68 = vunpack.c.l.bf16 %v66
      %v69 = vmul.f32 %v67, 2.0
      %v70 = vmul.f32 %v68, 2.0
      %v71 = vld [vmem:[#allocation10] sm:$0xf]
      %v72 = vld [vmem:[#allocation10 + $0x4] sm:$0xf]
      %v73 = vunpack.c.l.bf16 %v71
      %v74 = vunpack.c.l.bf16 %v72
      %v75 = vmul.f32 %v69, %v73
      %v76 = vmul.f32 %v70, %v74
      %77 = vadd.xlane.f32.xlu0 %v75
      %v78 = vpop.xlane.xlu0 %77
      %79 = vadd.xlane.f32.xlu0 %v76
      %v80 = vpop.xlane.xlu0 %79
      %81 = vst.msk [vmem:[#allocation5] sm:$0xff] %vm60, %v78
      %82 = vst.msk [vmem:[#allocation5 + $0x8] sm:$0xff] %vm60, %v80
      %v83 = vpack.c.bf16 %v70, %v69
      %84 = vst [vmem:[#allocation2] sm:$0xff] %v83
    $region29: #{tpu_custom_call.1} parent=1 // pred_fallthru
      _
    %v85 = vld [vmem:[#allocation2] sm:$0xff]
    %v86 = vld [vmem:[#allocation8] sm:$0xf]
    %v87 = vld [vmem:[#allocation8 + $0x4] sm:$0xf]
    %v90 = vunpack.c.l.b16 %v86
    %v91 = vunpack.c.l.b16 %v87
    %v92 = vpack.c.b16 %v91, %v90
    %94 = vmatprep.subr.bf16.mxu0 0
    %95 = vmatpush1.bf16.xpose.msra.mxu0 %v92
    %96 = vmatprep.subr.bf16.mxu0 0
    %97 = vmatpush1.bf16.xpose.msra.mxu0 0
    %98 = vmatprep.subr.bf16.mxu0 0
    %99 = vmatpush1.bf16.xpose.msra.mxu0 0
    %100 = vmatprep.subr.bf16.mxu0 0
    %101 = vmatpush1.bf16.xpose.msra.mxu0 0
    %102 = vmatprep.subr.bf16.mxu0 0
    %103 = vmatpush1.bf16.xpose.msra.mxu0 0
    %104 = vmatprep.subr.bf16.mxu0 0
    %105 = vmatpush1.bf16.xpose.msra.mxu0 0
    %106 = vmatprep.subr.bf16.mxu0 0
    %107 = vmatpush1.bf16.xpose.msra.mxu0 0
    %108 = vmatprep.subr.bf16.mxu0 0
    %109 = vmatpush1.bf16.xpose.msra.mxu0 0
    %110 = vmatprep.subr.bf16.mxu0 0
    %111 = vmatpush1.bf16.xpose.msra.mxu0 0
    %112 = vmatprep.subr.bf16.mxu0 0
    %113 = vmatpush1.bf16.xpose.msra.mxu0 0
    %114 = vmatprep.subr.bf16.mxu0 0
    %115 = vmatpush1.bf16.xpose.msra.mxu0 0
    %116 = vmatprep.subr.bf16.mxu0 0
    %117 = vmatpush1.bf16.xpose.msra.mxu0 0
    %118 = vmatprep.subr.bf16.mxu0 0
    %119 = vmatpush1.bf16.xpose.msra.mxu0 0
    %120 = vmatprep.subr.bf16.mxu0 0
    %121 = vmatpush1.bf16.xpose.msra.mxu0 0
    %122 = vmatprep.subr.bf16.mxu0 0
    %123 = vmatpush1.bf16.xpose.msra.mxu0 0
    %124 = vmatprep.subr.bf16.mxu0 0
    %125 = vmatpush1.bf16.xpose.msra.mxu0 0
    %126 = vmatprep.mubr.bf16.mxu0 0
    %127 = vmatmul.mubr.bf16.gmra.mrb[0].mxu0 %v85
    %v128 = vpop.f32.mrb[0].mxu0
    %v129 = vadd.f32 0.0, %v128
    %v130 = vpop.f32.mrb[0].mxu0
    %v131 = vpop.f32.mrb[0].mxu0
    %v132 = vadd.f32 0.0, %v131
    %v133 = vpop.f32.mrb[0].mxu0
    %134 = vdwg.mxu0
    %s135 = smul.u32 0, 16
    %s136 = smul.u32 0, 16
    %s137 = sadd.s32 %s135, 16
    %p138 = scmp.lt.s32.totalorder %s136, %s137
    %s139 = sadd.s32 %s136, 16
    %p140 = scmp.lt.s32.totalorder %s135, %s139
    %p141 = pnand %p138, %p140
    %p142 = pneg %p141
    %p143 = scmp.gt.s32.totalorder %s139, 16
    %p144 = por %p142, %p143
    // Predicated region
    $region30: #{tpu_custom_call.1} parent=1 // pred_check
      %p145 = pneg %p144
    $region31: #{tpu_custom_call.1} parent=1 // pred_check_branch
      %147 = sbr.rel (%p145) target = $region33
    $region32: #{tpu_custom_call.1} parent=1 // pred_region
      %v148 = vlaneseq
      %v149 = vshrl.u32 %v148, 7
      %v150 = vadd.s32 %v149, 8
      %v151 = vstv %s135
      %v152 = vadd.s32 %v151, %v149
      %v153 = vadd.s32 %v151, %v150
      %v154 = vlaneseq
      %v155 = vand.u32 %v154, 127
      %v156 = vstv %s136
      %v157 = vadd.s32 %v156, %v155
      %vm158 = vcmp.eq.s32.totalorder %v157, %v152
      %vm159 = vcmp.eq.s32.totalorder %v157, %v153
      %vm160 = vcmp.ge.s32.totalorder %v157, 16
      %vm161 = vmor %vm158, %vm160
      %vm162 = vmor %vm159, %vm160
      %v163 = vsel %vm161, -1e+30, %v129
      %v164 = vsel %vm162, -1e+30, %v132
      %v165 = vld [vmem:[#allocation3] sm:$0xff]
      %v166 = vld [vmem:[#allocation3 + $0x8] sm:$0xff]
      %vm167 = vcmask 130048
      %v168 = vsel %vm167, %v163, -inf
      %169 = vmax.xlane.f32.xlu0 %v168
      %v170 = vpop.xlane.xlu0 %169
      %v171 = vsel %vm167, %v164, -inf
      %172 = vmax.xlane.f32.xlu0 %v171
      %v173 = vpop.xlane.xlu0 %172
      %v174 = vmax.f32 %v165, %v170
      %v175 = vmax.f32 %v166, %v173
      %v176 = vsub.f32 %v165, %v174
      %v177 = vsub.f32 %v166, %v175
      %v178 = vmul.f32 %v176, 1.442695
      %v179 = vpow.pop %v178
      %v180 = vmul.f32 %v177, 1.442695
      %v181 = vpow.pop %v180
      %v182 = vld [vmem:[#allocation4] sm:$0xff]
      %v183 = vld [vmem:[#allocation4 + $0x8] sm:$0xff]
      %v184 = vmul.f32 %v179, %v182
      %v185 = vmul.f32 %v181, %v183
      %187 = vset.pattern.permute.xlu0 0
      %188 = vperm.xlu0 %187, %v174
      %v189 = vpop.permute.xlu0 %188
      %192 = vset.pattern.permute.xlu0 0
      %193 = vperm.xlu0 %192, %v175
      %v194 = vpop.permute.xlu0 %193
      %v196 = vsub.f32 %v163, %v189
      %v197 = vsub.f32 %v164, %v194
      %v198 = vmul.f32 %v196, 1.442695
      %v199 = vpow.pop %v198
      %v200 = vmul.f32 %v197, 1.442695
      %v201 = vpow.pop %v200
      %v202 = vsel %vm167, %v199, 0.0
      %203 = vadd.xlane.f32.xlu0 %v202
      %v204 = vpop.xlane.xlu0 %203
      %v205 = vsel %vm167, %v201, 0.0
      %206 = vadd.xlane.f32.xlu0 %v205
      %v207 = vpop.xlane.xlu0 %206
      %v208 = vadd.f32 %v184, %v204
      %v209 = vadd.f32 %v185, %v207
      %vm210 = vcmask 7168
      %211 = vst.msk [vmem:[#allocation4] sm:$0xff] %vm210, %v208
      %212 = vst.msk [vmem:[#allocation4 + $0x8] sm:$0xff] %vm210, %v209
      %213 = vst.msk [vmem:[#allocation3] sm:$0xff] %vm210, %v174
      %214 = vst.msk [vmem:[#allocation3 + $0x8] sm:$0xff] %vm210, %v175
    $region33: #{tpu_custom_call.1} parent=1 // pred_fallthru
      _
    %p215 = pneg %p144
    // Predicated region
    $region34: #{tpu_custom_call.1} parent=1 // pred_check
      _
    $region35: #{tpu_custom_call.1} parent=1 // pred_check_branch
      %217 = sbr.rel (%p144) target = $region37
    $region36: #{tpu_custom_call.1} parent=1 // pred_region
      %v218 = vld [vmem:[#allocation3] sm:$0xff]
      %v219 = vld [vmem:[#allocation3 + $0x8] sm:$0xff]
      %vm220 = vcmask 130048
      %v221 = vsel %vm220, %v129, -inf
      %222 = vmax.xlane.f32.xlu0 %v221
      %v223 = vpop.xlane.xlu0 %222
      %v224 = vsel %vm220, %v132, -inf
      %225 = vmax.xlane.f32.xlu0 %v224
      %v226 = vpop.xlane.xlu0 %225
      %v227 = vmax.f32 %v218, %v223
      %v228 = vmax.f32 %v219, %v226
      %v229 = vsub.f32 %v218, %v227
      %v230 = vsub.f32 %v219, %v228
      %v231 = vmul.f32 %v229, 1.442695
      %v232 = vpow.pop %v231
      %v233 = vmul.f32 %v230, 1.442695
      %v234 = vpow.pop %v233
      %v235 = vld [vmem:[#allocation4] sm:$0xff]
      %v236 = vld [vmem:[#allocation4 + $0x8] sm:$0xff]
      %v237 = vmul.f32 %v232, %v235
      %v238 = vmul.f32 %v234, %v236
      %240 = vset.pattern.permute.xlu0 0
      %241 = vperm.xlu0 %240, %v227
      %v242 = vpop.permute.xlu0 %241
      %245 = vset.pattern.permute.xlu0 0
      %246 = vperm.xlu0 %245, %v228
      %v247 = vpop.permute.xlu0 %246
      %v249 = vsub.f32 %v129, %v242
      %v250 = vsub.f32 %v132, %v247
      %v251 = vmul.f32 %v249, 1.442695
      %v252 = vpow.pop %v251
      %v253 = vmul.f32 %v250, 1.442695
      %v254 = vpow.pop %v253
      %v255 = vsel %vm220, %v252, 0.0
      %256 = vadd.xlane.f32.xlu0 %v255
      %v257 = vpop.xlane.xlu0 %256
      %v258 = vsel %vm220, %v254, 0.0
      %259 = vadd.xlane.f32.xlu0 %v258
      %v260 = vpop.xlane.xlu0 %259
      %v261 = vadd.f32 %v237, %v257
      %v262 = vadd.f32 %v238, %v260
      %vm263 = vcmask 7168
      %264 = vst.msk [vmem:[#allocation4] sm:$0xff] %vm263, %v261
      %265 = vst.msk [vmem:[#allocation4 + $0x8] sm:$0xff] %vm263, %v262
      %266 = vst.msk [vmem:[#allocation3] sm:$0xff] %vm263, %v227
      %267 = vst.msk [vmem:[#allocation3 + $0x8] sm:$0xff] %vm263, %v228
    $region37: #{tpu_custom_call.1} parent=1 // pred_fallthru
      _
    // Predicated region
    $region38: #{tpu_custom_call.1} parent=1 // pred_check
      %p268 = pneg %p56
    $region39: #{tpu_custom_call.1} parent=1 // pred_check_branch
      %270 = sbr.rel (%p268) target = $region41
    $region40: #{tpu_custom_call.1} parent=1 // pred_region
      %v271 = vld [vmem:[#allocation3] sm:$0xff]
      %v272 = vld [vmem:[#allocation3 + $0x8] sm:$0xff]
      %v273 = vld [vmem:[#allocation4] sm:$0xff]
      %v274 = vld [vmem:[#allocation4 + $0x8] sm:$0xff]
      %v275 = vlog2.pop %v273
      %v276 = vmul.f32 %v275, 0.6931472
      %v277 = vlog2.pop %v274
      %v278 = vmul.f32 %v277, 0.6931472
      %v279 = vadd.f32 %v271, %v276
      %v280 = vadd.f32 %v272, %v278
      %v281 = vld [vmem:[#allocation5] sm:$0xff]
      %v282 = vld [vmem:[#allocation5 + $0x8] sm:$0xff]
      %v283 = vsub.f32 %v279, %v281
      %v284 = vsub.f32 %v280, %v282
      %v285 = vlaneseq
      %v286 = vshrl.u32 %v285, 7
      %v287 = vadd.s32 %v286, 8
      %v288 = vstv %s135
      %v289 = vadd.s32 %v288, %v286
      %v290 = vadd.s32 %v288, %v287
      %vm291 = vcmp.lt.s32.totalorder %v289, 16
      %vm292 = vcmp.lt.s32.totalorder %v290, 16
      %v293 = vsel %vm291, %v283, 0.0
      %v294 = vsel %vm292, %v284, 0.0
      %vm295 = vcmask 7168
      %296 = vst.msk [vmem:[%s3] sm:$0xff] %vm295, %v293
      %297 = vst.msk [vmem:[%s3 + $0x8] sm:$0xff] %vm295, %v294
    $region41: #{tpu_custom_call.1} parent=1 // pred_fallthru
      _
    // Predicated region
    $region42: #{tpu_custom_call.1} parent=1 // pred_check
      _
    $region43: #{tpu_custom_call.1} parent=1 // pred_check_branch
      %299 = sbr.rel (0) target = $region45
    $region44: #{tpu_custom_call.1} parent=1 // pred_region
      _
    $region45: #{tpu_custom_call.1} parent=1 // pred_fallthru
      _
    // Predicated region
    $region46: #{tpu_custom_call.1} parent=1 // pred_check
      _
    $region47: #{tpu_custom_call.1} parent=1 // pred_check_branch
      %301 = sbr.rel (0) target = $region49
    $region48: #{tpu_custom_call.1} parent=1 // pred_region
      _
    $region49: #{tpu_custom_call.1} parent=1 // pred_fallthru
      _
    %302 = vsyncpa [#allocation7], 1
    %303 = vsyncpa [#allocation9], 1

</llo_original>
